<compile_context>
chip_gen: v7x
topology: tpu7x:2x2x1
jax: 0.10.0
libtpu: 0.0.40
codegen_flags: <defaults>
</compile_context>

<pallas_src>
import functools
import math

import jax
import jax.numpy as jnp
from jax import lax
from jax.experimental import pallas as pl
from jax.experimental.pallas import tpu as pltpu


def _attn_kernel(x_ref, w_ref, b_ref, mask_ref, o_ref):
    # x_ref: (n, D) with n = b_tile * S rows (b_tile stacked problems).
    x = x_ref[...]

    # One fused, MXU-shaped projection for the whole tile:
    # (n, D) @ (D, 3D) + (1, 3D).  1/sqrt(D) is pre-folded into the K slice.
    qkv = jnp.dot(x, w_ref[...], preferred_element_type=jnp.float32) + b_ref[...]

    D = w_ref.shape[0]
    q = qkv[:, :D]
    k = qkv[:, D:2 * D]
    v = qkv[:, 2 * D:]

    # Block-diagonal scores: one (n, D) x (n, D)^T matmul for the whole tile.
    # mask_ref holds attn_mask on diagonal (S, S) blocks and -1e30 off-block,
    # so cross-problem entries vanish (exp underflows to exactly 0) while the
    # softmax rows stay lane-dense (n lanes instead of 12).
    qk = lax.dot_general(
        q, k,
        dimension_numbers=(((1,), (1,)), ((), ())),
        preferred_element_type=jnp.float32,
    ) + mask_ref[...]

    # Numerically-stable softmax over the last dim (exact math for 1e-5 tol;
    # one reciprocal per row instead of a per-element divide).
    m = jnp.max(qk, axis=-1, keepdims=True)
    e = jnp.exp(qk - m)
    s = jnp.sum(e, axis=-1, keepdims=True)
    a = e * (1.0 / s)

    # o = a @ v ; off-block entries of `a` are exactly 0, so this equals the
    # per-problem result.
    o_ref[...] = jnp.dot(a, v, preferred_element_type=jnp.float32).astype(o_ref.dtype)


def _fuse_params(wq, bq, wk, bk, wv, bv):
    """Constant parameter prep (do once, outside the per-call path):
    pre-transpose (out,in)->(in,out), fuse Q/K/V, fold 1/sqrt(D) into K."""
    D = wq.shape[1]
    scale = 1.0 / math.sqrt(D)
    w_fused = jnp.concatenate([wq.T, wk.T * scale, wv.T], axis=1)          # (D, 3D)
    b_fused = jnp.concatenate([bq, bk * scale, bv], axis=1).reshape(1, -1)  # (1, 3D)
    return w_fused, b_fused


def _block_diag_mask(attn_mask, b_tile):
    """Additive mask for a tile of b_tile stacked problems: attn_mask on the
    diagonal (S, S) blocks, -1e30 everywhere else (kills cross-problem terms)."""
    S = attn_mask.shape[0]
    n = b_tile * S
    blk = jnp.arange(n) // S
    same = blk[:, None] == blk[None, :]
    tiled = jnp.tile(attn_mask.astype(jnp.float32), (b_tile, b_tile))
    return jnp.where(same, tiled, jnp.float32(-1e30))


@functools.partial(jax.jit, static_argnames=("b_tile",))
def attention(x, w_fused, b_fused, big_mask, *, b_tile):
    """Batched attention: x is (B, S, D); returns (B, S, D)."""
    B, S, D = x.shape
    nb = pl.cdiv(B, b_tile)
    Bp = nb * b_tile
    if nb > 1:
        # Sublane constraint on the row-tile when the batch is actually tiled.
        assert (b_tile * S) % 8 == 0, "b_tile * S must be a multiple of 8"
    if Bp != B:
        x = jnp.concatenate([x, jnp.zeros((Bp - B, S, D), x.dtype)], axis=0)

    n = b_tile * S
    assert big_mask.shape == (n, n)
    # Wrapper-side layout plumbing only: stack the tile's problems as rows.
    x2 = x.reshape(Bp * S, D)

    out2 = pl.pallas_call(
        _attn_kernel,
        out_shape=jax.ShapeDtypeStruct((Bp * S, D), jnp.float32),
        grid=(nb,),
        in_specs=[
            pl.BlockSpec((n, D), lambda i: (i, 0)),            # x tile
            pl.BlockSpec(w_fused.shape, lambda i: (0, 0)),     # fused W (resident)
            pl.BlockSpec(b_fused.shape, lambda i: (0, 0)),     # fused b (resident)
            pl.BlockSpec((n, n), lambda i: (0, 0)),            # block-diag mask (resident)
        ],
        out_specs=pl.BlockSpec((n, D), lambda i: (i, 0)),
        compiler_params=pltpu.CompilerParams(
            dimension_semantics=("parallel",),                 # v7x: split grid over 2 TCs
            vmem_limit_bytes=32 * 1024 * 1024,                 # sized for v7x's smaller VMEM
        ),
    )(x2, w_fused, b_fused, big_mask)

    return out2.reshape(Bp, S, D)[:B]


def model_forward(x, wq, bq, wk, bk, wv, bv, attn_mask, *, b_tile=32):
    """Equivalent of Model.forward; x is (S, D) or a batch (B, S, D).
    (In a serving loop, fuse params / build the mask once and call `attention`
    directly; they are rebuilt here only for convenience.)"""
    single = x.ndim == 2
    if single:
        x = x[None]
    b_tile = max(1, min(b_tile, x.shape[0]))
    w_fused, b_fused = _fuse_params(wq, bq, wk, bk, wv, bv)
    big_mask = _block_diag_mask(attn_mask, b_tile)
    out = attention(x, w_fused, b_fused, big_mask, b_tile=b_tile)
    return out[0] if single else out


def reference(x, wq, bq, wk, bk, wv, bv, attn_mask):
    q = x @ wq.T + bq
    k = x @ wk.T + bk
    v = x @ wv.T + bv
    k = k / math.sqrt(k.shape[-1])
    qk = jnp.einsum('...qd,...kd->...qk', q, k) + attn_mask
    a = jax.nn.softmax(qk, axis=-1)
    return jnp.einsum('...qk,...kd->...qd', a, v)


if __name__ == "__main__":
    S, D = 12, 8
    B = 256          # batch of independent (12, 8) problems for the grid demo
    b_tile = 32      # problems per grid step -> 384-row / 384-lane tiles

    key = jax.random.PRNGKey(0)
    ks = jax.random.split(key, 9)

    # Deterministic "Linear(8, 8)" parameters (PyTorch-style (out, in) shapes).
    bound = 1.0 / math.sqrt(D)
    wq = jax.random.uniform(ks[1], (D, D), jnp.float32, -bound, bound)
    bq = jax.random.uniform(ks[2], (1, D), jnp.float32, -bound, bound)
    wk = jax.random.uniform(ks[3], (D, D), jnp.float32, -bound, bound)
    bk = jax.random.uniform(ks[4], (1, D), jnp.float32, -bound, bound)
    wv = jax.random.uniform(ks[5], (D, D), jnp.float32, -bound, bound)
    bv = jax.random.uniform(ks[6], (1, D), jnp.float32, -bound, bound)
    # TODO(synk): attn_mask is an undefined global in the original module;
    # it is defined deterministically in-script as a (S, S) additive mask.
    attn_mask = jax.random.normal(ks[7], (S, S), dtype=jnp.float32)

    # --- module-exact single-problem forward: x1 = randn(12, 8) ---
    x1 = jax.random.normal(ks[0], (S, D), dtype=jnp.float32)
    o1 = jax.block_until_ready(model_forward(x1, wq, bq, wk, bk, wv, bv, attn_mask))
    r1 = reference(x1, wq, bq, wk, bk, wv, bv, attn_mask)
    assert o1.shape == (S, D)
    assert jnp.allclose(o1, r1, atol=1e-5, rtol=1e-5), "single-problem mismatch"

    # --- batched path: params/mask prepared once, one pallas_call over a grid ---
    xb = jax.random.normal(ks[8], (B, S, D), dtype=jnp.float32)
    w_fused, b_fused = _fuse_params(wq, bq, wk, bk, wv, bv)
    big_mask = _block_diag_mask(attn_mask, b_tile)
    ob = jax.block_until_ready(attention(xb, w_fused, b_fused, big_mask, b_tile=b_tile))
    rb = reference(xb, wq, bq, wk, bk, wv, bv, attn_mask)
    assert ob.shape == (B, S, D)
    assert jnp.allclose(ob, rb, atol=1e-5, rtol=1e-5), "batched mismatch"

    print("KERNEL_OK")
</pallas_src>

<mosaic_0001>
module attributes {stable_mosaic.version = 11 : i64} {
  func.func @_attn_kernel(%arg0: i32, %arg1: memref<12x8xf32, #tpu.memory_space<vmem>>, %arg2: memref<8x24xf32, #tpu.memory_space<vmem>>, %arg3: memref<1x24xf32, #tpu.memory_space<vmem>>, %arg4: memref<12x12xf32, #tpu.memory_space<vmem>>, %arg5: memref<12x8xf32, #tpu.memory_space<vmem>>) attributes {dimension_semantics = [#tpu.dimension_semantics<parallel>], iteration_bounds = array<i64: 1>, scalar_prefetch = 0 : i64, scratch_operands = 0 : i64, tpu.core_type = #tpu.core_type<tc>, window_params = [{transform_indices = @transform_0, window_bounds = array<i64: 12, 8>}, {pipeline_mode = #tpu.pipeline_mode<synchronous>, transform_indices = @transform_1, window_bounds = array<i64: 8, 24>}, {pipeline_mode = #tpu.pipeline_mode<synchronous>, transform_indices = @transform_2, window_bounds = array<i64: 1, 24>}, {pipeline_mode = #tpu.pipeline_mode<synchronous>, transform_indices = @transform_3, window_bounds = array<i64: 12, 12>}, {transform_indices = @transform_4, window_bounds = array<i64: 12, 8>}]} {
    %c0 = arith.constant 0 : index
    %c0_0 = arith.constant 0 : index
    %0 = vector.load %arg1[%c0, %c0_0] : memref<12x8xf32, #tpu.memory_space<vmem>>, vector<12x8xf32>
    %c0_1 = arith.constant 0 : index
    %c0_2 = arith.constant 0 : index
    %1 = vector.load %arg2[%c0_1, %c0_2] : memref<8x24xf32, #tpu.memory_space<vmem>>, vector<8x24xf32>
    %cst = arith.constant dense<0.000000e+00> : vector<12x24xf32>
    %2 = tpu.matmul %0, %1, %cst {dimension_numbers = #tpu.dot_dimension_numbers<[1], [0], [0], [1], [0, 0, 1, 1], [], []>} : vector<12x8xf32>, vector<8x24xf32>, vector<12x24xf32> -> vector<12x24xf32>
    %c0_3 = arith.constant 0 : index
    %c0_4 = arith.constant 0 : index
    %3 = vector.load %arg3[%c0_3, %c0_4] : memref<1x24xf32, #tpu.memory_space<vmem>>, vector<1x24xf32>
    %4 = vector.broadcast %3 : vector<1x24xf32> to vector<12x24xf32>
    %5 = arith.addf %2, %4 : vector<12x24xf32>
    %6 = vector.extract_strided_slice %5 {offsets = [0, 0], sizes = [12, 8], strides = [1, 1]} : vector<12x24xf32> to vector<12x8xf32>
    %7 = vector.extract_strided_slice %5 {offsets = [0, 8], sizes = [12, 8], strides = [1, 1]} : vector<12x24xf32> to vector<12x8xf32>
    %8 = vector.extract_strided_slice %5 {offsets = [0, 16], sizes = [12, 8], strides = [1, 1]} : vector<12x24xf32> to vector<12x8xf32>
    %cst_5 = arith.constant dense<0.000000e+00> : vector<12x12xf32>
    %9 = tpu.matmul %6, %7, %cst_5 {dimension_numbers = #tpu.dot_dimension_numbers<[1], [1], [0], [0], [0, 0, 1, 0], [], []>} : vector<12x8xf32>, vector<12x8xf32>, vector<12x12xf32> -> vector<12x12xf32>
    %c0_6 = arith.constant 0 : index
    %c0_7 = arith.constant 0 : index
    %10 = vector.load %arg4[%c0_6, %c0_7] : memref<12x12xf32, #tpu.memory_space<vmem>>, vector<12x12xf32>
    %11 = arith.addf %9, %10 : vector<12x12xf32>
    %cst_8 = arith.constant dense<0xFF800000> : vector<12xf32>
    %12 = vector.multi_reduction <maximumf>, %11, %cst_8 [1] : vector<12x12xf32> to vector<12xf32>
    %13 = vector.shape_cast %12 : vector<12xf32> to vector<12x1xf32>
    %14 = vector.broadcast %13 : vector<12x1xf32> to vector<12x12xf32>
    %15 = arith.subf %11, %14 : vector<12x12xf32>
    %16 = math.exp %15 : vector<12x12xf32>
    %cst_9 = arith.constant dense<0.000000e+00> : vector<12xf32>
    %17 = vector.multi_reduction <add>, %16, %cst_9 [1] : vector<12x12xf32> to vector<12xf32>
    %18 = vector.shape_cast %17 : vector<12xf32> to vector<12x1xf32>
    %cst_10 = arith.constant 1.000000e+00 : f32
    %19 = vector.broadcast %cst_10 : f32 to vector<12x1xf32>
    %20 = arith.divf %19, %18 : vector<12x1xf32>
    %21 = vector.broadcast %20 : vector<12x1xf32> to vector<12x12xf32>
    %22 = arith.mulf %16, %21 : vector<12x12xf32>
    %cst_11 = arith.constant dense<0.000000e+00> : vector<12x8xf32>
    %23 = tpu.matmul %22, %8, %cst_11 {dimension_numbers = #tpu.dot_dimension_numbers<[1], [0], [0], [1], [0, 0, 1, 1], [], []>} : vector<12x12xf32>, vector<12x8xf32>, vector<12x8xf32> -> vector<12x8xf32>
    %c0_12 = arith.constant 0 : index
    %c0_13 = arith.constant 0 : index
    %24 = vector.load %arg5[%c0_12, %c0_13] : memref<12x8xf32, #tpu.memory_space<vmem>>, vector<12x8xf32>
    tpu.vector_store %arg5[%c0_12, %c0_13], %23 {strides = array<i32>} : memref<12x8xf32, #tpu.memory_space<vmem>>, vector<12x8xf32>,
    return
  }
  func.func @transform_0(%arg0: i32) -> (i32, i32) {
    %c0_i32 = arith.constant 0 : i32
    %c0_i32_0 = arith.constant 0 : i32
    return %arg0, %c0_i32 : i32, i32
  }
  func.func @transform_1(%arg0: i32) -> (i32, i32) {
    %c0_i32 = arith.constant 0 : i32
    %c0_i32_0 = arith.constant 0 : i32
    %c0_i32_1 = arith.constant 0 : i32
    return %c0_i32, %c0_i32_0 : i32, i32
  }
  func.func @transform_2(%arg0: i32) -> (i32, i32) {
    %c0_i32 = arith.constant 0 : i32
    %c0_i32_0 = arith.constant 0 : i32
    %c0_i32_1 = arith.constant 0 : i32
    return %c0_i32, %c0_i32_0 : i32, i32
  }
  func.func @transform_3(%arg0: i32) -> (i32, i32) {
    %c0_i32 = arith.constant 0 : i32
    %c0_i32_0 = arith.constant 0 : i32
    %c0_i32_1 = arith.constant 0 : i32
    return %c0_i32, %c0_i32_0 : i32, i32
  }
  func.func @transform_4(%arg0: i32) -> (i32, i32) {
    %c0_i32 = arith.constant 0 : i32
    %c0_i32_0 = arith.constant 0 : i32
    return %arg0, %c0_i32 : i32, i32
  }
}

</mosaic_0001>

<llo_original>
// kernel: attention.1
$region0: #{attention.1}
  #allocation0 [shape = 'u32[]', space=smem, size = 0x4, offset = 0x4, fixed_abs, tag = 'smem constant byte address 0x4 - core index']
  #allocation1 [shape = 'u32[144,128]{1,0:T(1,128)}', space=vmem, size = 0x12000, scoped, tag = 'internal scratch']
  %s0 = inlined_call_operand.vmem [shape: f32[12,8], index: 0, kind: input, shape index: {}]
  %s1 = inlined_call_operand.vmem [shape: f32[8,24], index: 1, kind: input, shape index: {}]
  %s2 = inlined_call_operand.vmem [shape: f32[1,24], index: 2, kind: input, shape index: {}]
  %s3 = inlined_call_operand.vmem [shape: f32[12,12], index: 3, kind: input, shape index: {}]
  %s4 = inlined_call_operand.vmem [shape: f32[12,8], index: 4, kind: output, shape index: {}]
  %s5 = sld [smem:[#allocation0]]
  $region26: #{attention.1} parent=0
    _
  %s7 = ssub.s32 1, %s5
  %s8 = scalar_select 0, %s7, %s5
  // Predicated region
  $region2: #{attention.1} parent=0 // pred_check
    _
  $region3: #{attention.1} parent=0 // pred_check_branch
    %10 = sbr.rel (0) target = $region5
  $region4: #{attention.1} parent=0 // pred_region
    _
  $region5: #{attention.1} parent=0 // pred_fallthru
    _
  // Predicated region
  $region6: #{attention.1} parent=0 // pred_check
    _
  $region7: #{attention.1} parent=0 // pred_check_branch
    %12 = sbr.rel (0) target = $region9
  $region8: #{attention.1} parent=0 // pred_region
    _
  $region9: #{attention.1} parent=0 // pred_fallthru
    _
  // Predicated region
  $region10: #{attention.1} parent=0 // pred_check
    _
  $region11: #{attention.1} parent=0 // pred_check_branch
    %14 = sbr.rel (0) target = $region13
  $region12: #{attention.1} parent=0 // pred_region
    _
  $region13: #{attention.1} parent=0 // pred_fallthru
    _
  // Predicated region
  $region14: #{attention.1} parent=0 // pred_check
    _
  $region15: #{attention.1} parent=0 // pred_check_branch
    %16 = sbr.rel (0) target = $region17
  $region16: #{attention.1} parent=0 // pred_region
    _
  $region17: #{attention.1} parent=0 // pred_fallthru
    _
  %v17 = vld [vmem:[%s0] sm:$0xff]
  %v18 = vld [vmem:[%s0 + $0x8] sm:$0xf]
  %v19 = vld [vmem:[%s1] sm:$0xff]
  %v20 = vld [vmem:[%s2] sm:$0x1]
  %v22 = vlaneseq
  %v23 = vshrl.u32 %v22, 7
  %v24 = vsub.s32 0, %v23
  %v25 = vrot.slane %v20, %v24
  %vm27 = vcmask 64512
  %v29 = vsel %vm27, %v17, 0
  %v32 = vsel %vm27, %v18, 0
  %34 = vmatprep.subr.mxu0 0.0
  %35 = vmatpush1.msra.mxu0 %v19
  %36 = vmatprep.subr.mxu0 0.0
  %37 = vmatpush1.msra.mxu0 0.0
  %38 = vmatprep.subr.mxu0 0.0
  %39 = vmatpush1.msra.mxu0 0.0
  %40 = vmatprep.subr.mxu0 0.0
  %41 = vmatpush1.msra.mxu0 0.0
  %42 = vmatprep.subr.mxu0 0.0
  %43 = vmatpush1.msra.mxu0 0.0
  %44 = vmatprep.subr.mxu0 0.0
  %45 = vmatpush1.msra.mxu0 0.0
  %46 = vmatprep.subr.mxu0 0.0
  %47 = vmatpush1.msra.mxu0 0.0
  %48 = vmatprep.subr.mxu0 0.0
  %49 = vmatpush1.msra.mxu0 0.0
  %50 = vmatprep.subr.mxu0 0.0
  %51 = vmatpush1.msra.mxu0 0.0
  %52 = vmatprep.subr.mxu0 0.0
  %53 = vmatpush1.msra.mxu0 0.0
  %54 = vmatprep.subr.mxu0 0.0
  %55 = vmatpush1.msra.mxu0 0.0
  %56 = vmatprep.subr.mxu0 0.0
  %57 = vmatpush1.msra.mxu0 0.0
  %58 = vmatprep.subr.mxu0 0.0
  %59 = vmatpush1.msra.mxu0 0.0
  %60 = vmatprep.subr.mxu0 0.0
  %61 = vmatpush1.msra.mxu0 0.0
  %62 = vmatprep.subr.mxu0 0.0
  %63 = vmatpush1.msra.mxu0 0.0
  %64 = vmatprep.subr.mxu0 0.0
  %65 = vmatpush1.msra.mxu0 0.0
  %66 = vmatprep.subr.mxu0 0.0
  %67 = vmatpush1.msra.mxu0 0.0
  %68 = vmatprep.subr.mxu0 0.0
  %69 = vmatpush1.msra.mxu0 0.0
  %70 = vmatprep.subr.mxu0 0.0
  %71 = vmatpush1.msra.mxu0 0.0
  %72 = vmatprep.subr.mxu0 0.0
  %73 = vmatpush1.msra.mxu0 0.0
  %74 = vmatprep.subr.mxu0 0.0
  %75 = vmatpush1.msra.mxu0 0.0
  %76 = vmatprep.subr.mxu0 0.0
  %77 = vmatpush1.msra.mxu0 0.0
  %78 = vmatprep.subr.mxu0 0.0
  %79 = vmatpush1.msra.mxu0 0.0
  %80 = vmatprep.subr.mxu0 0.0
  %81 = vmatpush1.msra.mxu0 0.0
  %82 = vmatprep.subr.mxu0 0.0
  %83 = vmatpush1.msra.mxu0 0.0
  %84 = vmatprep.subr.mxu0 0.0
  %85 = vmatpush1.msra.mxu0 0.0
  %86 = vmatprep.subr.mxu0 0.0
  %87 = vmatpush1.msra.mxu0 0.0
  %88 = vmatprep.subr.mxu0 0.0
  %89 = vmatpush1.msra.mxu0 0.0
  %90 = vmatprep.subr.mxu0 0.0
  %91 = vmatpush1.msra.mxu0 0.0
  %92 = vmatprep.subr.mxu0 0.0
  %93 = vmatpush1.msra.mxu0 0.0
  %94 = vmatprep.subr.mxu0 0.0
  %95 = vmatpush1.msra.mxu0 0.0
  %96 = vmatprep.subr.mxu0 0.0
  %97 = vmatpush1.msra.mxu0 0.0
  %98 = vmatprep.mubr.f32.mxu0 0.0
  %99 = vmatmul.mubr.f32.gmra.mrb[0].mxu0 %v29
  %v100 = vpop.f32.mrb[0].mxu0
  %v101 = vadd.f32 %v25, %v100
  %v102 = vpop.f32.mrb[0].mxu0
  %103 = vmatprep.mubr.f32.mxu0 0.0
  %104 = vmatmul.mubr.f32.gmra.mrb[0].mxu0 %v32
  %v105 = vpop.f32.mrb[0].mxu0
  %v106 = vadd.f32 %v25, %v105
  %v107 = vpop.f32.mrb[0].mxu0
  %108 = vdwg.mxu0
  %v109 = vld [vmem:[%s3] sm:$0xff]
  %v110 = vld [vmem:[%s3 + $0x8] sm:$0xf]
  %113 = vrot.lane.b32.xlu0 %v101, 120
  %v114 = vpop.permute.xlu0 %113
  %115 = vrot.lane.b32.xlu0 %v106, 120
  %v116 = vpop.permute.xlu0 %115
  %v117 = vsel %vm27, %v101, 0
  %v119 = vsel %vm27, %v106, 0
  %v121 = vsel %vm27, %v114, 0
  %v123 = vsel %vm27, %v116, 0
  %125 = vmatprep.subr.mxu0 0.0
  %126 = vmatpush1.xpose.msra.mxu0 %v121
  %127 = vmatprep.subr.mxu0 0.0
  %128 = vmatpush1.xpose.msra.mxu0 %v123
  %129 = vmatprep.subr.mxu0 0.0
  %130 = vmatpush1.xpose.msra.mxu0 0.0
  %131 = vmatprep.subr.mxu0 0.0
  %132 = vmatpush1.xpose.msra.mxu0 0.0
  %133 = vmatprep.subr.mxu0 0.0
  %134 = vmatpush1.xpose.msra.mxu0 0.0
  %135 = vmatprep.subr.mxu0 0.0
  %136 = vmatpush1.xpose.msra.mxu0 0.0
  %137 = vmatprep.subr.mxu0 0.0
  %138 = vmatpush1.xpose.msra.mxu0 0.0
  %139 = vmatprep.subr.mxu0 0.0
  %140 = vmatpush1.xpose.msra.mxu0 0.0
  %141 = vmatprep.subr.mxu0 0.0
  %142 = vmatpush1.xpose.msra.mxu0 0.0
  %143 = vmatprep.subr.mxu0 0.0
  %144 = vmatpush1.xpose.msra.mxu0 0.0
  %145 = vmatprep.subr.mxu0 0.0
  %146 = vmatpush1.xpose.msra.mxu0 0.0
  %147 = vmatprep.subr.mxu0 0.0
  %148 = vmatpush1.xpose.msra.mxu0 0.0
  %149 = vmatprep.subr.mxu0 0.0
  %150 = vmatpush1.xpose.msra.mxu0 0.0
  %151 = vmatprep.subr.mxu0 0.0
  %152 = vmatpush1.xpose.msra.mxu0 0.0
  %153 = vmatprep.subr.mxu0 0.0
  %154 = vmatpush1.xpose.msra.mxu0 0.0
  %155 = vmatprep.subr.mxu0 0.0
  %156 = vmatpush1.xpose.msra.mxu0 0.0
  %157 = vmatprep.subr.mxu0 0.0
  %158 = vmatpush1.xpose.msra.mxu0 0.0
  %159 = vmatprep.subr.mxu0 0.0
  %160 = vmatpush1.xpose.msra.mxu0 0.0
  %161 = vmatprep.subr.mxu0 0.0
  %162 = vmatpush1.xpose.msra.mxu0 0.0
  %163 = vmatprep.subr.mxu0 0.0
  %164 = vmatpush1.xpose.msra.mxu0 0.0
  %165 = vmatprep.subr.mxu0 0.0
  %166 = vmatpush1.xpose.msra.mxu0 0.0
  %167 = vmatprep.subr.mxu0 0.0
  %168 = vmatpush1.xpose.msra.mxu0 0.0
  %169 = vmatprep.subr.mxu0 0.0
  %170 = vmatpush1.xpose.msra.mxu0 0.0
  %171 = vmatprep.subr.mxu0 0.0
  %172 = vmatpush1.xpose.msra.mxu0 0.0
  %173 = vmatprep.subr.mxu0 0.0
  %174 = vmatpush1.xpose.msra.mxu0 0.0
  %175 = vmatprep.subr.mxu0 0.0
  %176 = vmatpush1.xpose.msra.mxu0 0.0
  %177 = vmatprep.subr.mxu0 0.0
  %178 = vmatpush1.xpose.msra.mxu0 0.0
  %179 = vmatprep.subr.mxu0 0.0
  %180 = vmatpush1.xpose.msra.mxu0 0.0
  %181 = vmatprep.subr.mxu0 0.0
  %182 = vmatpush1.xpose.msra.mxu0 0.0
  %183 = vmatprep.subr.mxu0 0.0
  %184 = vmatpush1.xpose.msra.mxu0 0.0
  %185 = vmatprep.subr.mxu0 0.0
  %186 = vmatpush1.xpose.msra.mxu0 0.0
  %187 = vmatprep.subr.mxu0 0.0
  %188 = vmatpush1.xpose.msra.mxu0 0.0
  %189 = vmatprep.mubr.f32.mxu0 0.0
  %190 = vmatmul.mubr.f32.gmra.mrb[0].mxu0 %v117
  %v191 = vpop.f32.mrb[0].mxu0
  %v192 = vadd.f32 %v109, %v191
  %v193 = vpop.f32.mrb[0].mxu0
  %194 = vmatprep.mubr.f32.mxu0 0.0
  %195 = vmatmul.mubr.f32.gmra.mrb[0].mxu0 %v119
  %v196 = vpop.f32.mrb[0].mxu0
  %v197 = vadd.f32 %v110, %v196
  %v198 = vpop.f32.mrb[0].mxu0
  %199 = vdwg.mxu0
  %vm200 = vcmask 97280
  %v201 = vsel %vm200, %v192, -inf
  %202 = vmax.xlane.f32.xlu0 %v201
  %v203 = vpop.xlane.xlu0 %202
  %vm204 = vcmask 93184
  %v205 = vsel %vm204, %v197, -inf
  %206 = vmax.xlane.f32.xlu0 %v205
  %v207 = vpop.xlane.xlu0 %206
  %v208 = vsub.f32 %v192, %v203
  %v209 = vsub.f32 %v197, %v207
  %v210 = vmul.f32 %v208, 1.442695
  %v211 = vpow.pop %v210
  %v212 = vmul.f32 %v209, 1.442695
  %v213 = vpow.pop %v212
  %v214 = vsel %vm200, %v211, 0.0
  %215 = vadd.xlane.f32.xlu0 %v214
  %v216 = vpop.xlane.xlu0 %215
  %v217 = vsel %vm204, %v213, 0.0
  %218 = vadd.xlane.f32.xlu0 %v217
  %v219 = vpop.xlane.xlu0 %218
  %v220 = vrcp.pop %v216
  %v221 = vmul.f32 1.0, %v220
  %v222 = vrcp.pop %v219
  %v223 = vmul.f32 1.0, %v222
  %v224 = vmul.f32 %v211, %v221
  %v225 = vmul.f32 %v213, %v223
  %226 = vrot.lane.b32.xlu0 %v101, 112
  %v227 = vpop.permute.xlu0 %226
  %228 = vrot.lane.b32.xlu0 %v106, 112
  %v229 = vpop.permute.xlu0 %228
  %v232 = vsel %vm200, %v224, 0
  %v235 = vsel %vm200, %v225, 0
  %vm237 = vcmask 1043456
  %v238 = vsel %vm237, %v229, 0
  %240 = vmatprep.subr.mxu0 0.0
  %241 = vmatpush1.msra.mxu0 %v227
  %242 = vmatprep.subr.mxu0 0.0
  %243 = vmatpush1.msra.mxu0 %v238
  %244 = vmatprep.subr.mxu0 0.0
  %245 = vmatpush1.msra.mxu0 0.0
  %246 = vmatprep.subr.mxu0 0.0
  %247 = vmatpush1.msra.mxu0 0.0
  %248 = vmatprep.subr.mxu0 0.0
  %249 = vmatpush1.msra.mxu0 0.0
  %250 = vmatprep.subr.mxu0 0.0
  %251 = vmatpush1.msra.mxu0 0.0
  %252 = vmatprep.subr.mxu0 0.0
  %253 = vmatpush1.msra.mxu0 0.0
  %254 = vmatprep.subr.mxu0 0.0
  %255 = vmatpush1.msra.mxu0 0.0
  %256 = vmatprep.subr.mxu0 0.0
  %257 = vmatpush1.msra.mxu0 0.0
  %258 = vmatprep.subr.mxu0 0.0
  %259 = vmatpush1.msra.mxu0 0.0
  %260 = vmatprep.subr.mxu0 0.0
  %261 = vmatpush1.msra.mxu0 0.0
  %262 = vmatprep.subr.mxu0 0.0
  %263 = vmatpush1.msra.mxu0 0.0
  %264 = vmatprep.subr.mxu0 0.0
  %265 = vmatpush1.msra.mxu0 0.0
  %266 = vmatprep.subr.mxu0 0.0
  %267 = vmatpush1.msra.mxu0 0.0
  %268 = vmatprep.subr.mxu0 0.0
  %269 = vmatpush1.msra.mxu0 0.0
  %270 = vmatprep.subr.mxu0 0.0
  %271 = vmatpush1.msra.mxu0 0.0
  %272 = vmatprep.subr.mxu0 0.0
  %273 = vmatpush1.msra.mxu0 0.0
  %274 = vmatprep.subr.mxu0 0.0
  %275 = vmatpush1.msra.mxu0 0.0
  %276 = vmatprep.subr.mxu0 0.0
  %277 = vmatpush1.msra.mxu0 0.0
  %278 = vmatprep.subr.mxu0 0.0
  %279 = vmatpush1.msra.mxu0 0.0
  %280 = vmatprep.subr.mxu0 0.0
  %281 = vmatpush1.msra.mxu0 0.0
  %282 = vmatprep.subr.mxu0 0.0
  %283 = vmatpush1.msra.mxu0 0.0
  %284 = vmatprep.subr.mxu0 0.0
  %285 = vmatpush1.msra.mxu0 0.0
  %286 = vmatprep.subr.mxu0 0.0
  %287 = vmatpush1.msra.mxu0 0.0
  %288 = vmatprep.subr.mxu0 0.0
  %289 = vmatpush1.msra.mxu0 0.0
  %290 = vmatprep.subr.mxu0 0.0
  %291 = vmatpush1.msra.mxu0 0.0
  %292 = vmatprep.subr.mxu0 0.0
  %293 = vmatpush1.msra.mxu0 0.0
  %294 = vmatprep.subr.mxu0 0.0
  %295 = vmatpush1.msra.mxu0 0.0
  %296 = vmatprep.subr.mxu0 0.0
  %297 = vmatpush1.msra.mxu0 0.0
  %298 = vmatprep.subr.mxu0 0.0
  %299 = vmatpush1.msra.mxu0 0.0
  %300 = vmatprep.subr.mxu0 0.0
  %301 = vmatpush1.msra.mxu0 0.0
  %302 = vmatprep.subr.mxu0 0.0
  %303 = vmatpush1.msra.mxu0 0.0
  %304 = vmatprep.mubr.f32.mxu0 0.0
  %305 = vmatmul.mubr.f32.gmra.mrb[0].mxu0 %v232
  %v306 = vpop.f32.mrb[0].mxu0
  %v307 = vadd.f32 0.0, %v306
  %v308 = vpop.f32.mrb[0].mxu0
  %309 = vmatprep.mubr.f32.mxu0 0.0
  %310 = vmatmul.mubr.f32.gmra.mrb[0].mxu0 %v235
  %v311 = vpop.f32.mrb[0].mxu0
  %v312 = vadd.f32 0.0, %v311
  %v313 = vpop.f32.mrb[0].mxu0
  %314 = vdwg.mxu0
  %315 = vst.msk [vmem:[%s4] sm:$0xff] %vm27, %v307
  %vm316 = vcmask 60416
  %317 = vst.msk [vmem:[%s4 + $0x8] sm:$0xf] %vm316, %v312
  // Predicated region
  $region18: #{attention.1} parent=0 // pred_check
    _
  $region19: #{attention.1} parent=0 // pred_check_branch
    %319 = sbr.rel (0) target = $region21
  $region20: #{attention.1} parent=0 // pred_region
    _
  $region21: #{attention.1} parent=0 // pred_fallthru
    _
  // Predicated region
  $region22: #{attention.1} parent=0 // pred_check
    _
  $region23: #{attention.1} parent=0 // pred_check_branch
    %321 = sbr.rel (0) target = $region25
  $region24: #{attention.1} parent=0 // pred_region
    _
  $region25: #{attention.1} parent=0 // pred_fallthru
    _

</llo_original>
